<compile_context>
chip_gen: v7x
topology: tpu7x:2x2x1
jax: 0.10.0
libtpu: 0.0.40
codegen_flags: <defaults>
</compile_context>

<pallas_src>
import functools

import jax
import jax.numpy as jnp
import numpy as np
from jax.experimental import pallas as pl
from jax.experimental.pallas import tpu as pltpu

_LANE = 128


# ----------------------------- Pallas kernel ------------------------------- #

def _fused_kernel(x_ref, y_ref, w1_ref, b1_ref, w2_ref, b2_ref,
                  pred_ref, loss_ref, *, n_sup, n_qry, n_classes):
    """Fused MetaGNN forward on the concatenated [sup; qry] batch.

    x_ref    : VMEM [N, C_pad] f32   (lane-padded raw logits / model input)
    y_ref    : SMEM [N]        int32 (labels, scalar path)
    w1_ref   : VMEM [C_pad, H_pad],  b1_ref: VMEM [1, H_pad]
    w2_ref   : VMEM [H_pad, C_pad],  b2_ref: VMEM [1, C_pad]
    pred_ref : VMEM [N, C_pad] f32   (lane-dense model output, sliced outside)
    loss_ref : SMEM [2]        f32   (loss_ref[0]=sup CE, loss_ref[1]=qry CE)
    """
    x = x_ref[...]                                                     # [N, C_pad] f32

    # ---- wrapped model: relu(x @ W1 + b1) @ W2 + b2 (MXU, f32 accumulation) ----
    h = jnp.dot(x, w1_ref[...], preferred_element_type=jnp.float32) + b1_ref[...]
    h = jnp.maximum(h, 0.0)
    pred = jnp.dot(h, w2_ref[...], preferred_element_type=jnp.float32) + b2_ref[...]
    pred_ref[...] = pred.astype(pred_ref.dtype)

    # ---- CrossEntropy on the raw inputs (faithful to the PyTorch source) ----
    col = jax.lax.broadcasted_iota(jnp.int32, x.shape, 1)              # [N, C_pad]
    row = jax.lax.broadcasted_iota(jnp.int32, x.shape, 0)              # [N, C_pad]

    # mask the zero-padded lanes out of the softmax
    xm = jnp.where(col < n_classes, x, jnp.float32(-1e30))
    m = jnp.max(xm, axis=-1, keepdims=True)                            # [N, 1]
    lse = m + jnp.log(jnp.sum(jnp.exp(xm - m), axis=-1, keepdims=True))

    # per-set logsumexp sums via row masks (no value slicing / element extracts)
    row1 = jax.lax.broadcasted_iota(jnp.int32, lse.shape, 0)           # [N, 1]
    sup_lse = jnp.sum(jnp.where(row1 < n_sup, lse, 0.0))
    qry_lse = jnp.sum(jnp.where(row1 >= n_sup, lse, 0.0))

    # target-logit sums: labels read as scalars from SMEM, iota+compare+select
    # (keeps the "gather" on the VPU; no cross-lane dynamic gather).
    sup_tgt = jnp.float32(0.0)
    qry_tgt = jnp.float32(0.0)
    for i in range(n_sup + n_qry):                                     # static unroll
        yi = y_ref[i]                                                  # SMEM scalar
        t_i = jnp.sum(jnp.where((row == i) & (col == yi), xm, 0.0))
        if i < n_sup:
            sup_tgt = sup_tgt + t_i
        else:
            qry_tgt = qry_tgt + t_i

    loss_ref[0] = (sup_lse - sup_tgt) / n_sup
    loss_ref[1] = (qry_lse - qry_tgt) / n_qry


# ----------------------------- JAX wrapper ---------------------------------- #

def _pad_to(n, mult):
    return max(mult, ((n + mult - 1) // mult) * mult)


def meta_gnn_forward(params, sup_x, sup_y, qry_x, qry_y):
    """Mirrors MetaGNN.forward: model() on both sets + CE loss on the raw inputs."""
    w1, b1, w2, b2 = params
    n_sup, c = sup_x.shape
    n_qry = qry_x.shape[0]
    hid = w1.shape[1]
    c_out = w2.shape[1]
    n_total = n_sup + n_qry

    c_pad = _pad_to(c, _LANE)
    h_pad = _pad_to(hid, _LANE)
    co_pad = _pad_to(c_out, _LANE)

    # one activation slab for both sets; lane dims zero-padded to MXU/vreg width
    x_all = jnp.concatenate([sup_x, qry_x], axis=0).astype(jnp.float32)
    y_all = jnp.concatenate([sup_y, qry_y], axis=0).astype(jnp.int32)

    x_p = jnp.pad(x_all, ((0, 0), (0, c_pad - c)))
    w1_p = jnp.pad(w1.astype(jnp.float32), ((0, c_pad - c), (0, h_pad - hid)))
    b1_p = jnp.pad(b1.astype(jnp.float32), ((0, 0), (0, h_pad - hid)))
    w2_p = jnp.pad(w2.astype(jnp.float32), ((0, h_pad - hid), (0, co_pad - c_out)))
    b2_p = jnp.pad(b2.astype(jnp.float32), ((0, 0), (0, co_pad - c_out)))

    kernel = functools.partial(_fused_kernel, n_sup=n_sup, n_qry=n_qry, n_classes=c)

    pred_p, losses = pl.pallas_call(
        kernel,
        out_shape=(
            jax.ShapeDtypeStruct((n_total, co_pad), jnp.float32),  # lane-dense preds
            jax.ShapeDtypeStruct((2,), jnp.float32),               # [sup_loss, qry_loss]
        ),
        in_specs=[
            pl.BlockSpec(memory_space=pltpu.MemorySpace.VMEM),   # x (padded)
            pl.BlockSpec(memory_space=pltpu.MemorySpace.SMEM),   # labels (scalar path)
            pl.BlockSpec(memory_space=pltpu.MemorySpace.VMEM),   # w1
            pl.BlockSpec(memory_space=pltpu.MemorySpace.VMEM),   # b1
            pl.BlockSpec(memory_space=pltpu.MemorySpace.VMEM),   # w2
            pl.BlockSpec(memory_space=pltpu.MemorySpace.VMEM),   # b2
        ],
        out_specs=(
            pl.BlockSpec(memory_space=pltpu.MemorySpace.VMEM),
            pl.BlockSpec(memory_space=pltpu.MemorySpace.SMEM),
        ),
    )(x_p, y_all, w1_p, b1_p, w2_p, b2_p)

    preds = pred_p[:, :c_out]
    sup_pred = preds[:n_sup]
    qry_pred = preds[n_sup:]
    # TODO(synk): original forward/loss bodies end with `...`; return all four results.
    return sup_pred, losses[0], qry_pred, losses[1]


# ------------------------------ reference ----------------------------------- #

def _ref_mlp(x, w1, b1, w2, b2):
    h = jnp.maximum(x @ w1 + b1, 0.0)
    return h @ w2 + b2


def _ref_ce(x, y):
    lse = jax.scipy.special.logsumexp(x, axis=-1)
    tgt = jnp.take_along_axis(x, y[:, None], axis=-1)[:, 0]
    return jnp.mean(lse - tgt)


# -------------------------------- main --------------------------------------- #

if __name__ == "__main__":
    N_SUP, N_QRY = 8, 8        # support / query set sizes
    C = 16                     # number of classes (= logit dim of raw x)
    HID = 32                   # hidden width of the wrapped model

    key = jax.random.PRNGKey(0)
    k1, k2, k3, k4, k5, k6, k7, k8 = jax.random.split(key, 8)

    # deterministic parameter init for the wrapped "model"
    w1 = jax.random.normal(k1, (C, HID), jnp.float32) * 0.1
    b1 = jax.random.normal(k2, (1, HID), jnp.float32) * 0.01
    w2 = jax.random.normal(k3, (HID, C), jnp.float32) * 0.1
    b2 = jax.random.normal(k4, (1, C), jnp.float32) * 0.01
    params = (w1, b1, w2, b2)

    sup_x = jax.random.normal(k5, (N_SUP, C), jnp.float32)
    sup_y = jax.random.randint(k6, (N_SUP,), 0, C, jnp.int32)
    qry_x = jax.random.normal(k7, (N_QRY, C), jnp.float32)
    qry_y = jax.random.randint(k8, (N_QRY,), 0, C, jnp.int32)

    sup_pred, sup_loss, qry_pred, qry_loss = jax.block_until_ready(
        meta_gnn_forward(params, sup_x, sup_y, qry_x, qry_y)
    )

    # correctness check against plain-JAX reference
    np.testing.assert_allclose(np.asarray(sup_pred),
                               np.asarray(_ref_mlp(sup_x, *params)), atol=1e-5, rtol=1e-5)
    np.testing.assert_allclose(np.asarray(qry_pred),
                               np.asarray(_ref_mlp(qry_x, *params)), atol=1e-5, rtol=1e-5)
    np.testing.assert_allclose(np.asarray(sup_loss),
                               np.asarray(_ref_ce(sup_x, sup_y)), atol=1e-5, rtol=1e-5)
    np.testing.assert_allclose(np.asarray(qry_loss),
                               np.asarray(_ref_ce(qry_x, qry_y)), atol=1e-5, rtol=1e-5)

    print("KERNEL_OK")
</pallas_src>

<mosaic_0001>
module attributes {stable_mosaic.version = 11 : i64} {
  func.func @_fused_kernel(%arg0: memref<16x128xf32, #tpu.memory_space<vmem>>, %arg1: memref<16xi32, #tpu.memory_space<smem>>, %arg2: memref<128x128xf32, #tpu.memory_space<vmem>>, %arg3: memref<1x128xf32, #tpu.memory_space<vmem>>, %arg4: memref<128x128xf32, #tpu.memory_space<vmem>>, %arg5: memref<1x128xf32, #tpu.memory_space<vmem>>, %arg6: memref<16x128xf32, #tpu.memory_space<vmem>>, %arg7: memref<2xf32, #tpu.memory_space<smem>>) attributes {dimension_semantics = [], scalar_prefetch = 0 : i64, scratch_operands = 0 : i64, tpu.core_type = #tpu.core_type<tc>} {
    %c0 = arith.constant 0 : index
    %c0_0 = arith.constant 0 : index
    %0 = vector.load %arg0[%c0, %c0_0] : memref<16x128xf32, #tpu.memory_space<vmem>>, vector<16x128xf32>
    %c0_1 = arith.constant 0 : index
    %c0_2 = arith.constant 0 : index
    %1 = vector.load %arg2[%c0_1, %c0_2] : memref<128x128xf32, #tpu.memory_space<vmem>>, vector<128x128xf32>
    %cst = arith.constant dense<0.000000e+00> : vector<16x128xf32>
    %2 = tpu.matmul %0, %1, %cst {dimension_numbers = #tpu.dot_dimension_numbers<[1], [0], [0], [1], [0, 0, 1, 1], [], []>} : vector<16x128xf32>, vector<128x128xf32>, vector<16x128xf32> -> vector<16x128xf32>
    %c0_3 = arith.constant 0 : index
    %c0_4 = arith.constant 0 : index
    %3 = vector.load %arg3[%c0_3, %c0_4] : memref<1x128xf32, #tpu.memory_space<vmem>>, vector<1x128xf32>
    %4 = vector.broadcast %3 : vector<1x128xf32> to vector<16x128xf32>
    %5 = arith.addf %2, %4 : vector<16x128xf32>
    %cst_5 = arith.constant 0.000000e+00 : f32
    %6 = vector.broadcast %cst_5 : f32 to vector<16x128xf32>
    %7 = arith.maximumf %5, %6 : vector<16x128xf32>
    %c0_6 = arith.constant 0 : index
    %c0_7 = arith.constant 0 : index
    %8 = vector.load %arg4[%c0_6, %c0_7] : memref<128x128xf32, #tpu.memory_space<vmem>>, vector<128x128xf32>
    %cst_8 = arith.constant dense<0.000000e+00> : vector<16x128xf32>
    %9 = tpu.matmul %7, %8, %cst_8 {dimension_numbers = #tpu.dot_dimension_numbers<[1], [0], [0], [1], [0, 0, 1, 1], [], []>} : vector<16x128xf32>, vector<128x128xf32>, vector<16x128xf32> -> vector<16x128xf32>
    %c0_9 = arith.constant 0 : index
    %c0_10 = arith.constant 0 : index
    %10 = vector.load %arg5[%c0_9, %c0_10] : memref<1x128xf32, #tpu.memory_space<vmem>>, vector<1x128xf32>
    %11 = vector.broadcast %10 : vector<1x128xf32> to vector<16x128xf32>
    %12 = arith.addf %9, %11 : vector<16x128xf32>
    %c0_11 = arith.constant 0 : index
    %c0_12 = arith.constant 0 : index
    %13 = vector.load %arg6[%c0_11, %c0_12] : memref<16x128xf32, #tpu.memory_space<vmem>>, vector<16x128xf32>
    tpu.vector_store %arg6[%c0_11, %c0_12], %12 {strides = array<i32>} : memref<16x128xf32, #tpu.memory_space<vmem>>, vector<16x128xf32>,
    %14 = tpu.iota {dimensions = array<i32: 1>} : vector<16x128xi32>
    %15 = tpu.iota {dimensions = array<i32: 0>} : vector<16x128xi32>
    %c16_i32 = arith.constant 16 : i32
    %16 = vector.broadcast %c16_i32 : i32 to vector<16x128xi32>
    %17 = arith.cmpi slt, %14, %16 : vector<16x128xi32>
    %cst_13 = arith.constant -1.000000e+30 : f32
    %18 = vector.broadcast %cst_13 : f32 to vector<16x128xf32>
    %19 = arith.select %17, %0, %18 : vector<16x128xi1>, vector<16x128xf32>
    %cst_14 = arith.constant dense<0xFF800000> : vector<16xf32>
    %20 = vector.multi_reduction <maximumf>, %19, %cst_14 [1] : vector<16x128xf32> to vector<16xf32>
    %21 = vector.shape_cast %20 : vector<16xf32> to vector<16x1xf32>
    %22 = vector.broadcast %21 : vector<16x1xf32> to vector<16x128xf32>
    %23 = arith.subf %19, %22 : vector<16x128xf32>
    %24 = math.exp %23 : vector<16x128xf32>
    %cst_15 = arith.constant dense<0.000000e+00> : vector<16xf32>
    %25 = vector.multi_reduction <add>, %24, %cst_15 [1] : vector<16x128xf32> to vector<16xf32>
    %26 = vector.shape_cast %25 : vector<16xf32> to vector<16x1xf32>
    %27 = math.log %26 : vector<16x1xf32>
    %28 = arith.addf %21, %27 : vector<16x1xf32>
    %29 = tpu.iota {dimensions = array<i32: 0>} : vector<16x1xi32>
    %c8_i32 = arith.constant 8 : i32
    %30 = vector.broadcast %c8_i32 : i32 to vector<16x1xi32>
    %31 = arith.cmpi slt, %29, %30 : vector<16x1xi32>
    %cst_16 = arith.constant 0.000000e+00 : f32
    %32 = vector.broadcast %cst_16 : f32 to vector<16x1xf32>
    %33 = arith.select %31, %28, %32 : vector<16x1xi1>, vector<16x1xf32>
    %34 = vector.shape_cast %33 : vector<16x1xf32> to vector<1x16x1xf32>
    %cst_17 = arith.constant dense<0.000000e+00> : vector<1xf32>
    %35 = vector.multi_reduction <add>, %34, %cst_17 [1, 2] : vector<1x16x1xf32> to vector<1xf32>
    %36 = vector.shape_cast %35 : vector<1xf32> to vector<1x1x1xf32>
    %37 = vector.extract %36[0, 0, 0] : f32 from vector<1x1x1xf32>
    %c8_i32_18 = arith.constant 8 : i32
    %38 = vector.broadcast %c8_i32_18 : i32 to vector<16x1xi32>
    %39 = arith.cmpi sge, %29, %38 : vector<16x1xi32>
    %cst_19 = arith.constant 0.000000e+00 : f32
    %40 = vector.broadcast %cst_19 : f32 to vector<16x1xf32>
    %41 = arith.select %39, %28, %40 : vector<16x1xi1>, vector<16x1xf32>
    %42 = vector.shape_cast %41 : vector<16x1xf32> to vector<1x16x1xf32>
    %cst_20 = arith.constant dense<0.000000e+00> : vector<1xf32>
    %43 = vector.multi_reduction <add>, %42, %cst_20 [1, 2] : vector<1x16x1xf32> to vector<1xf32>
    %44 = vector.shape_cast %43 : vector<1xf32> to vector<1x1x1xf32>
    %45 = vector.extract %44[0, 0, 0] : f32 from vector<1x1x1xf32>
    %c0_21 = arith.constant 0 : index
    %46 = memref.load %arg1[%c0_21] : memref<16xi32, #tpu.memory_space<smem>>
    %c0_i32 = arith.constant 0 : i32
    %47 = vector.broadcast %c0_i32 : i32 to vector<16x128xi32>
    %48 = arith.cmpi eq, %15, %47 : vector<16x128xi32>
    %49 = vector.broadcast %46 : i32 to vector<16x128xi32>
    %50 = arith.cmpi eq, %14, %49 : vector<16x128xi32>
    %51 = arith.andi %48, %50 : vector<16x128xi1>
    %cst_22 = arith.constant 0.000000e+00 : f32
    %52 = vector.broadcast %cst_22 : f32 to vector<16x128xf32>
    %53 = arith.select %51, %19, %52 : vector<16x128xi1>, vector<16x128xf32>
    %54 = vector.shape_cast %53 : vector<16x128xf32> to vector<1x16x128xf32>
    %cst_23 = arith.constant dense<0.000000e+00> : vector<1xf32>
    %55 = vector.multi_reduction <add>, %54, %cst_23 [1, 2] : vector<1x16x128xf32> to vector<1xf32>
    %56 = vector.shape_cast %55 : vector<1xf32> to vector<1x1x1xf32>
    %57 = vector.extract %56[0, 0, 0] : f32 from vector<1x1x1xf32>
    %cst_24 = arith.constant 0.000000e+00 : f32
    %58 = arith.addf %cst_24, %57 : f32
    %c1 = arith.constant 1 : index
    %59 = memref.load %arg1[%c1] : memref<16xi32, #tpu.memory_space<smem>>
    %c1_i32 = arith.constant 1 : i32
    %60 = vector.broadcast %c1_i32 : i32 to vector<16x128xi32>
    %61 = arith.cmpi eq, %15, %60 : vector<16x128xi32>
    %62 = vector.broadcast %59 : i32 to vector<16x128xi32>
    %63 = arith.cmpi eq, %14, %62 : vector<16x128xi32>
    %64 = arith.andi %61, %63 : vector<16x128xi1>
    %cst_25 = arith.constant 0.000000e+00 : f32
    %65 = vector.broadcast %cst_25 : f32 to vector<16x128xf32>
    %66 = arith.select %64, %19, %65 : vector<16x128xi1>, vector<16x128xf32>
    %67 = vector.shape_cast %66 : vector<16x128xf32> to vector<1x16x128xf32>
    %cst_26 = arith.constant dense<0.000000e+00> : vector<1xf32>
    %68 = vector.multi_reduction <add>, %67, %cst_26 [1, 2] : vector<1x16x128xf32> to vector<1xf32>
    %69 = vector.shape_cast %68 : vector<1xf32> to vector<1x1x1xf32>
    %70 = vector.extract %69[0, 0, 0] : f32 from vector<1x1x1xf32>
    %71 = arith.addf %58, %70 : f32
    %c2 = arith.constant 2 : index
    %72 = memref.load %arg1[%c2] : memref<16xi32, #tpu.memory_space<smem>>
    %c2_i32 = arith.constant 2 : i32
    %73 = vector.broadcast %c2_i32 : i32 to vector<16x128xi32>
    %74 = arith.cmpi eq, %15, %73 : vector<16x128xi32>
    %75 = vector.broadcast %72 : i32 to vector<16x128xi32>
    %76 = arith.cmpi eq, %14, %75 : vector<16x128xi32>
    %77 = arith.andi %74, %76 : vector<16x128xi1>
    %cst_27 = arith.constant 0.000000e+00 : f32
    %78 = vector.broadcast %cst_27 : f32 to vector<16x128xf32>
    %79 = arith.select %77, %19, %78 : vector<16x128xi1>, vector<16x128xf32>
    %80 = vector.shape_cast %79 : vector<16x128xf32> to vector<1x16x128xf32>
    %cst_28 = arith.constant dense<0.000000e+00> : vector<1xf32>
    %81 = vector.multi_reduction <add>, %80, %cst_28 [1, 2] : vector<1x16x128xf32> to vector<1xf32>
    %82 = vector.shape_cast %81 : vector<1xf32> to vector<1x1x1xf32>
    %83 = vector.extract %82[0, 0, 0] : f32 from vector<1x1x1xf32>
    %84 = arith.addf %71, %83 : f32
    %c3 = arith.constant 3 : index
    %85 = memref.load %arg1[%c3] : memref<16xi32, #tpu.memory_space<smem>>
    %c3_i32 = arith.constant 3 : i32
    %86 = vector.broadcast %c3_i32 : i32 to vector<16x128xi32>
    %87 = arith.cmpi eq, %15, %86 : vector<16x128xi32>
    %88 = vector.broadcast %85 : i32 to vector<16x128xi32>
    %89 = arith.cmpi eq, %14, %88 : vector<16x128xi32>
    %90 = arith.andi %87, %89 : vector<16x128xi1>
    %cst_29 = arith.constant 0.000000e+00 : f32
    %91 = vector.broadcast %cst_29 : f32 to vector<16x128xf32>
    %92 = arith.select %90, %19, %91 : vector<16x128xi1>, vector<16x128xf32>
    %93 = vector.shape_cast %92 : vector<16x128xf32> to vector<1x16x128xf32>
    %cst_30 = arith.constant dense<0.000000e+00> : vector<1xf32>
    %94 = vector.multi_reduction <add>, %93, %cst_30 [1, 2] : vector<1x16x128xf32> to vector<1xf32>
    %95 = vector.shape_cast %94 : vector<1xf32> to vector<1x1x1xf32>
    %96 = vector.extract %95[0, 0, 0] : f32 from vector<1x1x1xf32>
    %97 = arith.addf %84, %96 : f32
    %c4 = arith.constant 4 : index
    %98 = memref.load %arg1[%c4] : memref<16xi32, #tpu.memory_space<smem>>
    %c4_i32 = arith.constant 4 : i32
    %99 = vector.broadcast %c4_i32 : i32 to vector<16x128xi32>
    %100 = arith.cmpi eq, %15, %99 : vector<16x128xi32>
    %101 = vector.broadcast %98 : i32 to vector<16x128xi32>
    %102 = arith.cmpi eq, %14, %101 : vector<16x128xi32>
    %103 = arith.andi %100, %102 : vector<16x128xi1>
    %cst_31 = arith.constant 0.000000e+00 : f32
    %104 = vector.broadcast %cst_31 : f32 to vector<16x128xf32>
    %105 = arith.select %103, %19, %104 : vector<16x128xi1>, vector<16x128xf32>
    %106 = vector.shape_cast %105 : vector<16x128xf32> to vector<1x16x128xf32>
    %cst_32 = arith.constant dense<0.000000e+00> : vector<1xf32>
    %107 = vector.multi_reduction <add>, %106, %cst_32 [1, 2] : vector<1x16x128xf32> to vector<1xf32>
    %108 = vector.shape_cast %107 : vector<1xf32> to vector<1x1x1xf32>
    %109 = vector.extract %108[0, 0, 0] : f32 from vector<1x1x1xf32>
    %110 = arith.addf %97, %109 : f32
    %c5 = arith.constant 5 : index
    %111 = memref.load %arg1[%c5] : memref<16xi32, #tpu.memory_space<smem>>
    %c5_i32 = arith.constant 5 : i32
    %112 = vector.broadcast %c5_i32 : i32 to vector<16x128xi32>
    %113 = arith.cmpi eq, %15, %112 : vector<16x128xi32>
    %114 = vector.broadcast %111 : i32 to vector<16x128xi32>
    %115 = arith.cmpi eq, %14, %114 : vector<16x128xi32>
    %116 = arith.andi %113, %115 : vector<16x128xi1>
    %cst_33 = arith.constant 0.000000e+00 : f32
    %117 = vector.broadcast %cst_33 : f32 to vector<16x128xf32>
    %118 = arith.select %116, %19, %117 : vector<16x128xi1>, vector<16x128xf32>
    %119 = vector.shape_cast %118 : vector<16x128xf32> to vector<1x16x128xf32>
    %cst_34 = arith.constant dense<0.000000e+00> : vector<1xf32>
    %120 = vector.multi_reduction <add>, %119, %cst_34 [1, 2] : vector<1x16x128xf32> to vector<1xf32>
    %121 = vector.shape_cast %120 : vector<1xf32> to vector<1x1x1xf32>
    %122 = vector.extract %121[0, 0, 0] : f32 from vector<1x1x1xf32>
    %123 = arith.addf %110, %122 : f32
    %c6 = arith.constant 6 : index
    %124 = memref.load %arg1[%c6] : memref<16xi32, #tpu.memory_space<smem>>
    %c6_i32 = arith.constant 6 : i32
    %125 = vector.broadcast %c6_i32 : i32 to vector<16x128xi32>
    %126 = arith.cmpi eq, %15, %125 : vector<16x128xi32>
    %127 = vector.broadcast %124 : i32 to vector<16x128xi32>
    %128 = arith.cmpi eq, %14, %127 : vector<16x128xi32>
    %129 = arith.andi %126, %128 : vector<16x128xi1>
    %cst_35 = arith.constant 0.000000e+00 : f32
    %130 = vector.broadcast %cst_35 : f32 to vector<16x128xf32>
    %131 = arith.select %129, %19, %130 : vector<16x128xi1>, vector<16x128xf32>
    %132 = vector.shape_cast %131 : vector<16x128xf32> to vector<1x16x128xf32>
    %cst_36 = arith.constant dense<0.000000e+00> : vector<1xf32>
    %133 = vector.multi_reduction <add>, %132, %cst_36 [1, 2] : vector<1x16x128xf32> to vector<1xf32>
    %134 = vector.shape_cast %133 : vector<1xf32> to vector<1x1x1xf32>
    %135 = vector.extract %134[0, 0, 0] : f32 from vector<1x1x1xf32>
    %136 = arith.addf %123, %135 : f32
    %c7 = arith.constant 7 : index
    %137 = memref.load %arg1[%c7] : memref<16xi32, #tpu.memory_space<smem>>
    %c7_i32 = arith.constant 7 : i32
    %138 = vector.broadcast %c7_i32 : i32 to vector<16x128xi32>
    %139 = arith.cmpi eq, %15, %138 : vector<16x128xi32>
    %140 = vector.broadcast %137 : i32 to vector<16x128xi32>
    %141 = arith.cmpi eq, %14, %140 : vector<16x128xi32>
    %142 = arith.andi %139, %141 : vector<16x128xi1>
    %cst_37 = arith.constant 0.000000e+00 : f32
    %143 = vector.broadcast %cst_37 : f32 to vector<16x128xf32>
    %144 = arith.select %142, %19, %143 : vector<16x128xi1>, vector<16x128xf32>
    %145 = vector.shape_cast %144 : vector<16x128xf32> to vector<1x16x128xf32>
    %cst_38 = arith.constant dense<0.000000e+00> : vector<1xf32>
    %146 = vector.multi_reduction <add>, %145, %cst_38 [1, 2] : vector<1x16x128xf32> to vector<1xf32>
    %147 = vector.shape_cast %146 : vector<1xf32> to vector<1x1x1xf32>
    %148 = vector.extract %147[0, 0, 0] : f32 from vector<1x1x1xf32>
    %149 = arith.addf %136, %148 : f32
    %c8 = arith.constant 8 : index
    %150 = memref.load %arg1[%c8] : memref<16xi32, #tpu.memory_space<smem>>
    %c8_i32_39 = arith.constant 8 : i32
    %151 = vector.broadcast %c8_i32_39 : i32 to vector<16x128xi32>
    %152 = arith.cmpi eq, %15, %151 : vector<16x128xi32>
    %153 = vector.broadcast %150 : i32 to vector<16x128xi32>
    %154 = arith.cmpi eq, %14, %153 : vector<16x128xi32>
    %155 = arith.andi %152, %154 : vector<16x128xi1>
    %cst_40 = arith.constant 0.000000e+00 : f32
    %156 = vector.broadcast %cst_40 : f32 to vector<16x128xf32>
    %157 = arith.select %155, %19, %156 : vector<16x128xi1>, vector<16x128xf32>
    %158 = vector.shape_cast %157 : vector<16x128xf32> to vector<1x16x128xf32>
    %cst_41 = arith.constant dense<0.000000e+00> : vector<1xf32>
    %159 = vector.multi_reduction <add>, %158, %cst_41 [1, 2] : vector<1x16x128xf32> to vector<1xf32>
    %160 = vector.shape_cast %159 : vector<1xf32> to vector<1x1x1xf32>
    %161 = vector.extract %160[0, 0, 0] : f32 from vector<1x1x1xf32>
    %cst_42 = arith.constant 0.000000e+00 : f32
    %162 = arith.addf %cst_42, %161 : f32
    %c9 = arith.constant 9 : index
    %163 = memref.load %arg1[%c9] : memref<16xi32, #tpu.memory_space<smem>>
    %c9_i32 = arith.constant 9 : i32
    %164 = vector.broadcast %c9_i32 : i32 to vector<16x128xi32>
    %165 = arith.cmpi eq, %15, %164 : vector<16x128xi32>
    %166 = vector.broadcast %163 : i32 to vector<16x128xi32>
    %167 = arith.cmpi eq, %14, %166 : vector<16x128xi32>
    %168 = arith.andi %165, %167 : vector<16x128xi1>
    %cst_43 = arith.constant 0.000000e+00 : f32
    %169 = vector.broadcast %cst_43 : f32 to vector<16x128xf32>
    %170 = arith.select %168, %19, %169 : vector<16x128xi1>, vector<16x128xf32>
    %171 = vector.shape_cast %170 : vector<16x128xf32> to vector<1x16x128xf32>
    %cst_44 = arith.constant dense<0.000000e+00> : vector<1xf32>
    %172 = vector.multi_reduction <add>, %171, %cst_44 [1, 2] : vector<1x16x128xf32> to vector<1xf32>
    %173 = vector.shape_cast %172 : vector<1xf32> to vector<1x1x1xf32>
    %174 = vector.extract %173[0, 0, 0] : f32 from vector<1x1x1xf32>
    %175 = arith.addf %162, %174 : f32
    %c10 = arith.constant 10 : index
    %176 = memref.load %arg1[%c10] : memref<16xi32, #tpu.memory_space<smem>>
    %c10_i32 = arith.constant 10 : i32
    %177 = vector.broadcast %c10_i32 : i32 to vector<16x128xi32>
    %178 = arith.cmpi eq, %15, %177 : vector<16x128xi32>
    %179 = vector.broadcast %176 : i32 to vector<16x128xi32>
    %180 = arith.cmpi eq, %14, %179 : vector<16x128xi32>
    %181 = arith.andi %178, %180 : vector<16x128xi1>
    %cst_45 = arith.constant 0.000000e+00 : f32
    %182 = vector.broadcast %cst_45 : f32 to vector<16x128xf32>
    %183 = arith.select %181, %19, %182 : vector<16x128xi1>, vector<16x128xf32>
    %184 = vector.shape_cast %183 : vector<16x128xf32> to vector<1x16x128xf32>
    %cst_46 = arith.constant dense<0.000000e+00> : vector<1xf32>
    %185 = vector.multi_reduction <add>, %184, %cst_46 [1, 2] : vector<1x16x128xf32> to vector<1xf32>
    %186 = vector.shape_cast %185 : vector<1xf32> to vector<1x1x1xf32>
    %187 = vector.extract %186[0, 0, 0] : f32 from vector<1x1x1xf32>
    %188 = arith.addf %175, %187 : f32
    %c11 = arith.constant 11 : index
    %189 = memref.load %arg1[%c11] : memref<16xi32, #tpu.memory_space<smem>>
    %c11_i32 = arith.constant 11 : i32
    %190 = vector.broadcast %c11_i32 : i32 to vector<16x128xi32>
    %191 = arith.cmpi eq, %15, %190 : vector<16x128xi32>
    %192 = vector.broadcast %189 : i32 to vector<16x128xi32>
    %193 = arith.cmpi eq, %14, %192 : vector<16x128xi32>
    %194 = arith.andi %191, %193 : vector<16x128xi1>
    %cst_47 = arith.constant 0.000000e+00 : f32
    %195 = vector.broadcast %cst_47 : f32 to vector<16x128xf32>
    %196 = arith.select %194, %19, %195 : vector<16x128xi1>, vector<16x128xf32>
    %197 = vector.shape_cast %196 : vector<16x128xf32> to vector<1x16x128xf32>
    %cst_48 = arith.constant dense<0.000000e+00> : vector<1xf32>
    %198 = vector.multi_reduction <add>, %197, %cst_48 [1, 2] : vector<1x16x128xf32> to vector<1xf32>
    %199 = vector.shape_cast %198 : vector<1xf32> to vector<1x1x1xf32>
    %200 = vector.extract %199[0, 0, 0] : f32 from vector<1x1x1xf32>
    %201 = arith.addf %188, %200 : f32
    %c12 = arith.constant 12 : index
    %202 = memref.load %arg1[%c12] : memref<16xi32, #tpu.memory_space<smem>>
    %c12_i32 = arith.constant 12 : i32
    %203 = vector.broadcast %c12_i32 : i32 to vector<16x128xi32>
    %204 = arith.cmpi eq, %15, %203 : vector<16x128xi32>
    %205 = vector.broadcast %202 : i32 to vector<16x128xi32>
    %206 = arith.cmpi eq, %14, %205 : vector<16x128xi32>
    %207 = arith.andi %204, %206 : vector<16x128xi1>
    %cst_49 = arith.constant 0.000000e+00 : f32
    %208 = vector.broadcast %cst_49 : f32 to vector<16x128xf32>
    %209 = arith.select %207, %19, %208 : vector<16x128xi1>, vector<16x128xf32>
    %210 = vector.shape_cast %209 : vector<16x128xf32> to vector<1x16x128xf32>
    %cst_50 = arith.constant dense<0.000000e+00> : vector<1xf32>
    %211 = vector.multi_reduction <add>, %210, %cst_50 [1, 2] : vector<1x16x128xf32> to vector<1xf32>
    %212 = vector.shape_cast %211 : vector<1xf32> to vector<1x1x1xf32>
    %213 = vector.extract %212[0, 0, 0] : f32 from vector<1x1x1xf32>
    %214 = arith.addf %201, %213 : f32
    %c13 = arith.constant 13 : index
    %215 = memref.load %arg1[%c13] : memref<16xi32, #tpu.memory_space<smem>>
    %c13_i32 = arith.constant 13 : i32
    %216 = vector.broadcast %c13_i32 : i32 to vector<16x128xi32>
    %217 = arith.cmpi eq, %15, %216 : vector<16x128xi32>
    %218 = vector.broadcast %215 : i32 to vector<16x128xi32>
    %219 = arith.cmpi eq, %14, %218 : vector<16x128xi32>
    %220 = arith.andi %217, %219 : vector<16x128xi1>
    %cst_51 = arith.constant 0.000000e+00 : f32
    %221 = vector.broadcast %cst_51 : f32 to vector<16x128xf32>
    %222 = arith.select %220, %19, %221 : vector<16x128xi1>, vector<16x128xf32>
    %223 = vector.shape_cast %222 : vector<16x128xf32> to vector<1x16x128xf32>
    %cst_52 = arith.constant dense<0.000000e+00> : vector<1xf32>
    %224 = vector.multi_reduction <add>, %223, %cst_52 [1, 2] : vector<1x16x128xf32> to vector<1xf32>
    %225 = vector.shape_cast %224 : vector<1xf32> to vector<1x1x1xf32>
    %226 = vector.extract %225[0, 0, 0] : f32 from vector<1x1x1xf32>
    %227 = arith.addf %214, %226 : f32
    %c14 = arith.constant 14 : index
    %228 = memref.load %arg1[%c14] : memref<16xi32, #tpu.memory_space<smem>>
    %c14_i32 = arith.constant 14 : i32
    %229 = vector.broadcast %c14_i32 : i32 to vector<16x128xi32>
    %230 = arith.cmpi eq, %15, %229 : vector<16x128xi32>
    %231 = vector.broadcast %228 : i32 to vector<16x128xi32>
    %232 = arith.cmpi eq, %14, %231 : vector<16x128xi32>
    %233 = arith.andi %230, %232 : vector<16x128xi1>
    %cst_53 = arith.constant 0.000000e+00 : f32
    %234 = vector.broadcast %cst_53 : f32 to vector<16x128xf32>
    %235 = arith.select %233, %19, %234 : vector<16x128xi1>, vector<16x128xf32>
    %236 = vector.shape_cast %235 : vector<16x128xf32> to vector<1x16x128xf32>
    %cst_54 = arith.constant dense<0.000000e+00> : vector<1xf32>
    %237 = vector.multi_reduction <add>, %236, %cst_54 [1, 2] : vector<1x16x128xf32> to vector<1xf32>
    %238 = vector.shape_cast %237 : vector<1xf32> to vector<1x1x1xf32>
    %239 = vector.extract %238[0, 0, 0] : f32 from vector<1x1x1xf32>
    %240 = arith.addf %227, %239 : f32
    %c15 = arith.constant 15 : index
    %241 = memref.load %arg1[%c15] : memref<16xi32, #tpu.memory_space<smem>>
    %c15_i32 = arith.constant 15 : i32
    %242 = vector.broadcast %c15_i32 : i32 to vector<16x128xi32>
    %243 = arith.cmpi eq, %15, %242 : vector<16x128xi32>
    %244 = vector.broadcast %241 : i32 to vector<16x128xi32>
    %245 = arith.cmpi eq, %14, %244 : vector<16x128xi32>
    %246 = arith.andi %243, %245 : vector<16x128xi1>
    %cst_55 = arith.constant 0.000000e+00 : f32
    %247 = vector.broadcast %cst_55 : f32 to vector<16x128xf32>
    %248 = arith.select %246, %19, %247 : vector<16x128xi1>, vector<16x128xf32>
    %249 = vector.shape_cast %248 : vector<16x128xf32> to vector<1x16x128xf32>
    %cst_56 = arith.constant dense<0.000000e+00> : vector<1xf32>
    %250 = vector.multi_reduction <add>, %249, %cst_56 [1, 2] : vector<1x16x128xf32> to vector<1xf32>
    %251 = vector.shape_cast %250 : vector<1xf32> to vector<1x1x1xf32>
    %252 = vector.extract %251[0, 0, 0] : f32 from vector<1x1x1xf32>
    %253 = arith.addf %240, %252 : f32
    %254 = arith.subf %37, %149 : f32
    %cst_57 = arith.constant 8.000000e+00 : f32
    %255 = arith.divf %254, %cst_57 : f32
    %c0_58 = arith.constant 0 : index
    %256 = memref.load %arg7[%c0_58] : memref<2xf32, #tpu.memory_space<smem>>
    memref.store %255, %arg7[%c0_58] : memref<2xf32, #tpu.memory_space<smem>>
    %257 = arith.subf %45, %253 : f32
    %cst_59 = arith.constant 8.000000e+00 : f32
    %258 = arith.divf %257, %cst_59 : f32
    %c1_60 = arith.constant 1 : index
    %259 = memref.load %arg7[%c1_60] : memref<2xf32, #tpu.memory_space<smem>>
    memref.store %258, %arg7[%c1_60] : memref<2xf32, #tpu.memory_space<smem>>
    return
  }
}

</mosaic_0001>

<llo_original>
// kernel: tpu_custom_call.1
$region0: #{tpu_custom_call.1}
  #allocation0 [shape = 'u32[]', space=smem, size = 0x4, offset = 0x4, fixed_abs, tag = 'smem constant byte address 0x4 - core index']
  #allocation1 [shape = 'u32[144,128]{1,0:T(1,128)}', space=vmem, size = 0x12000, scoped, tag = 'internal scratch']
  %s0 = inlined_call_operand.hbm [shape: f32[16,128], index: 0, kind: input, shape index: {}]
  %s1 = inlined_call_operand.vmem [shape: s32[16], index: 1, kind: input, shape index: {}]
  %s2 = inlined_call_operand.hbm [shape: f32[128,128], index: 2, kind: input, shape index: {}]
  %s3 = inlined_call_operand.vmem [shape: f32[1,128], index: 3, kind: input, shape index: {}]
  %s4 = inlined_call_operand.hbm [shape: f32[128,128], index: 4, kind: input, shape index: {}]
  %s5 = inlined_call_operand.vmem [shape: f32[1,128], index: 5, kind: input, shape index: {}]
  %s6 = inlined_call_operand.hbm [shape: f32[16,128], index: 6, kind: output, shape index: {0}]
  %s7 = inlined_call_operand.hbm [shape: f32[2], index: 7, kind: output, shape index: {1}]
  %8 = xla_tuple %s6, %s7
  %s9 = sld [smem:[#allocation0]]
  $region58: #{tpu_custom_call.1} parent=0
    _
  %s11 = ssub.s32 1, %s9
  %s12 = scalar_select 0, %s11, %s9
  $region1: #{tpu_custom_call.1} parent=0
    #allocation2 [shape = 'u8[8192]{0}', space=vmem, size = 0x2000, scoped, tag = 'input window, operand 0, single buffered']
    #allocation3 [shape = 's32[1]{0}', space=sflag, size = 0x4, scoped, tag = 'scoped memory for tpu_custom_call.1']
    #allocation4 [shape = 's32[1]{0}', space=sflag, size = 0x4, scoped, tag = 'scoped memory for tpu_custom_call.1']
    #allocation5 [shape = 's32[1]{0}', space=sflag, size = 0x4, scoped, tag = 'scoped memory for tpu_custom_call.1']
    #allocation6 [shape = 's32[1]{0}', space=sflag, size = 0x4, scoped, tag = 'scoped memory for tpu_custom_call.1']
    #allocation7 [shape = 'u8[512]{0}', space=smem, size = 0x200, scoped, tag = 'input window, operand 1, single buffered']
    #allocation8 [shape = 'u8[65536]{0}', space=vmem, size = 0x10000, scoped, tag = 'input window, operand 2, single buffered']
    #allocation9 [shape = 's32[1]{0}', space=sflag, size = 0x4, scoped, tag = 'scoped memory for tpu_custom_call.1']
    #allocation10 [shape = 'u8[65536]{0}', space=vmem, size = 0x10000, scoped, tag = 'input window, operand 4, single buffered']
    #allocation11 [shape = 'u8[8192]{0}', space=vmem, size = 0x2000, scoped, tag = 'output window, operand 0, single buffered']
    #allocation12 [shape = 'u8[512]{0}', space=smem, size = 0x200, scoped, tag = 'output window, operand 1, single buffered']
    %13 = vsyncpa [#allocation3], 0
    %14 = vsyncpa [#allocation6], 0
    %15 = vsyncpa [#allocation9], 0
    %16 = vsyncpa [#allocation4], 0
    %17 = vsyncpa [#allocation5], 0
    // Predicated region
    $region2: #{tpu_custom_call.1} parent=1 // pred_check
      _
    $region3: #{tpu_custom_call.1} parent=1 // pred_check_branch
      %19 = sbr.rel (0) target = $region5
    $region4: #{tpu_custom_call.1} parent=1 // pred_region
      %s21 = ssub.s32 256, 256
      %22 = vsyncadd [#allocation3], %s21
      %s23 = sshll.u32 [#allocation2], 4
      %s24 = int_to_ptr.vmem [resolvable:$true] %s23
      %29 = dma.hbm_to_vmem [thread:$0]  %s0, 256, %s24, [#allocation3], 128, 128, 8
    $region5: #{tpu_custom_call.1} parent=1 // pred_fallthru
      _
    // Predicated region
    $region6: #{tpu_custom_call.1} parent=1 // pred_check
      _
    $region7: #{tpu_custom_call.1} parent=1 // pred_check_branch
      %31 = sbr.rel (0) target = $region9
    $region8: #{tpu_custom_call.1} parent=1 // pred_region
      %s33 = ssub.s32 16, 16
      %34 = vsyncadd [#allocation6], %s33
      %s36 = sshll.u32 %s1, 4
      %s37 = int_to_ptr.vmem [resolvable:$true] %s36
      %39 = dma.vmem_to_smem %s37, 16, [#allocation7], [#allocation6]
    $region9: #{tpu_custom_call.1} parent=1 // pred_fallthru
      _
    // Predicated region
    $region10: #{tpu_custom_call.1} parent=1 // pred_check
      _
    $region11: #{tpu_custom_call.1} parent=1 // pred_check_branch
      %41 = sbr.rel (0) target = $region13
    $region12: #{tpu_custom_call.1} parent=1 // pred_region
      %s43 = ssub.s32 2048, 2048
      %44 = vsyncadd [#allocation9], %s43
      %s45 = sshll.u32 [#allocation8], 4
      %s46 = int_to_ptr.vmem [resolvable:$true] %s45
      %51 = dma.hbm_to_vmem [thread:$0]  %s2, 2048, %s46, [#allocation9], 128, 128, 8
    $region13: #{tpu_custom_call.1} parent=1 // pred_fallthru
      _
    // Predicated region
    $region14: #{tpu_custom_call.1} parent=1 // pred_check
      _
    $region15: #{tpu_custom_call.1} parent=1 // pred_check_branch
      %53 = sbr.rel (0) target = $region17
    $region16: #{tpu_custom_call.1} parent=1 // pred_region
      _
    $region17: #{tpu_custom_call.1} parent=1 // pred_fallthru
      _
    // Predicated region
    $region18: #{tpu_custom_call.1} parent=1 // pred_check
      _
    $region19: #{tpu_custom_call.1} parent=1 // pred_check_branch
      %55 = sbr.rel (0) target = $region21
    $region20: #{tpu_custom_call.1} parent=1 // pred_region
      %s57 = ssub.s32 2048, 2048
      %58 = vsyncadd [#allocation9], %s57
      %s59 = sshll.u32 [#allocation10], 4
      %s60 = int_to_ptr.vmem [resolvable:$true] %s59
      %65 = dma.hbm_to_vmem [thread:$0]  %s4, 2048, %s60, [#allocation9], 128, 128, 8
    $region21: #{tpu_custom_call.1} parent=1 // pred_fallthru
      _
    // Predicated region
    $region22: #{tpu_custom_call.1} parent=1 // pred_check
      _
    $region23: #{tpu_custom_call.1} parent=1 // pred_check_branch
      %67 = sbr.rel (0) target = $region25
    $region24: #{tpu_custom_call.1} parent=1 // pred_region
      _
    $region25: #{tpu_custom_call.1} parent=1 // pred_fallthru
      _
    // Predicated region
    $region26: #{tpu_custom_call.1} parent=1 // pred_check
      _
    $region27: #{tpu_custom_call.1} parent=1 // pred_check_branch
      %69 = sbr.rel (0) target = $region29
    $region28: #{tpu_custom_call.1} parent=1 // pred_region
      %70 = dma.done [#allocation3], 256
    $region29: #{tpu_custom_call.1} parent=1 // pred_fallthru
      _
    // Predicated region
    $region30: #{tpu_custom_call.1} parent=1 // pred_check
      _
    $region31: #{tpu_custom_call.1} parent=1 // pred_check_branch
      %72 = sbr.rel (0) target = $region33
    $region32: #{tpu_custom_call.1} parent=1 // pred_region
      %73 = dma.done [#allocation6], 16
    $region33: #{tpu_custom_call.1} parent=1 // pred_fallthru
      _
    // Predicated region
    $region34: #{tpu_custom_call.1} parent=1 // pred_check
      _
    $region35: #{tpu_custom_call.1} parent=1 // pred_check_branch
      %75 = sbr.rel (0) target = $region37
    $region36: #{tpu_custom_call.1} parent=1 // pred_region
      %76 = dma.done [#allocation9], 2048
    $region37: #{tpu_custom_call.1} parent=1 // pred_fallthru
      _
    // Predicated region
    $region38: #{tpu_custom_call.1} parent=1 // pred_check
      _
    $region39: #{tpu_custom_call.1} parent=1 // pred_check_branch
      %78 = sbr.rel (0) target = $region41
    $region40: #{tpu_custom_call.1} parent=1 // pred_region
      %79 = dma.done [#allocation9], 2048
    $region41: #{tpu_custom_call.1} parent=1 // pred_fallthru
      _
    %80 = sfence
    %v81 = vld [vmem:[#allocation2] sm:$0xff]
    %v82 = vld [vmem:[#allocation2 + $0x8] sm:$0xff]
    %v83 = vld [vmem:[#allocation8] sm:$0xff]
    %v84 = vld [vmem:[#allocation8 + $0x8] sm:$0xff]
    %v85 = vld [vmem:[#allocation8 + $0x10] sm:$0xff]
    %v86 = vld [vmem:[#allocation8 + $0x18] sm:$0xff]
    %v87 = vld [vmem:[#allocation8 + $0x20] sm:$0xff]
    %v88 = vld [vmem:[#allocation8 + $0x28] sm:$0xff]
    %v89 = vld [vmem:[#allocation8 + $0x30] sm:$0xff]
    %v90 = vld [vmem:[#allocation8 + $0x38] sm:$0xff]
    %v91 = vld [vmem:[#allocation8 + $0x40] sm:$0xff]
    %v92 = vld [vmem:[#allocation8 + $0x48] sm:$0xff]
    %v93 = vld [vmem:[#allocation8 + $0x50] sm:$0xff]
    %v94 = vld [vmem:[#allocation8 + $0x58] sm:$0xff]
    %v95 = vld [vmem:[#allocation8 + $0x60] sm:$0xff]
    %v96 = vld [vmem:[#allocation8 + $0x68] sm:$0xff]
    %v97 = vld [vmem:[#allocation8 + $0x70] sm:$0xff]
    %v98 = vld [vmem:[#allocation8 + $0x78] sm:$0xff]
    %v99 = vld [vmem:[%s3] sm:$0x1]
    %v101 = vlaneseq
    %v102 = vshrl.u32 %v101, 7
    %v103 = vsub.s32 0, %v102
    %v104 = vrot.slane %v99, %v103
    %106 = vmatprep.subr.mxu0 0.0
    %107 = vmatpush1.msra.mxu0 %v83
    %108 = vmatprep.subr.mxu0 0.0
    %109 = vmatpush1.msra.mxu0 %v84
    %110 = vmatprep.subr.mxu0 0.0
    %111 = vmatpush1.msra.mxu0 %v85
    %112 = vmatprep.subr.mxu0 0.0
    %113 = vmatpush1.msra.mxu0 %v86
    %114 = vmatprep.subr.mxu0 0.0
    %115 = vmatpush1.msra.mxu0 %v87
    %116 = vmatprep.subr.mxu0 0.0
    %117 = vmatpush1.msra.mxu0 %v88
    %118 = vmatprep.subr.mxu0 0.0
    %119 = vmatpush1.msra.mxu0 %v89
    %120 = vmatprep.subr.mxu0 0.0
    %121 = vmatpush1.msra.mxu0 %v90
    %122 = vmatprep.subr.mxu0 0.0
    %123 = vmatpush1.msra.mxu0 %v91
    %124 = vmatprep.subr.mxu0 0.0
    %125 = vmatpush1.msra.mxu0 %v92
    %126 = vmatprep.subr.mxu0 0.0
    %127 = vmatpush1.msra.mxu0 %v93
    %128 = vmatprep.subr.mxu0 0.0
    %129 = vmatpush1.msra.mxu0 %v94
    %130 = vmatprep.subr.mxu0 0.0
    %131 = vmatpush1.msra.mxu0 %v95
    %132 = vmatprep.subr.mxu0 0.0
    %133 = vmatpush1.msra.mxu0 %v96
    %134 = vmatprep.subr.mxu0 0.0
    %135 = vmatpush1.msra.mxu0 %v97
    %136 = vmatprep.subr.mxu0 0.0
    %137 = vmatpush1.msra.mxu0 %v98
    %138 = vmatprep.subr.mxu0 0.0
    %139 = vmatpush1.msra.mxu0 0.0
    %140 = vmatprep.subr.mxu0 0.0
    %141 = vmatpush1.msra.mxu0 0.0
    %142 = vmatprep.subr.mxu0 0.0
    %143 = vmatpush1.msra.mxu0 0.0
    %144 = vmatprep.subr.mxu0 0.0
    %145 = vmatpush1.msra.mxu0 0.0
    %146 = vmatprep.subr.mxu0 0.0
    %147 = vmatpush1.msra.mxu0 0.0
    %148 = vmatprep.subr.mxu0 0.0
    %149 = vmatpush1.msra.mxu0 0.0
    %150 = vmatprep.subr.mxu0 0.0
    %151 = vmatpush1.msra.mxu0 0.0
    %152 = vmatprep.subr.mxu0 0.0
    %153 = vmatpush1.msra.mxu0 0.0
    %154 = vmatprep.subr.mxu0 0.0
    %155 = vmatpush1.msra.mxu0 0.0
    %156 = vmatprep.subr.mxu0 0.0
    %157 = vmatpush1.msra.mxu0 0.0
    %158 = vmatprep.subr.mxu0 0.0
    %159 = vmatpush1.msra.mxu0 0.0
    %160 = vmatprep.subr.mxu0 0.0
    %161 = vmatpush1.msra.mxu0 0.0
    %162 = vmatprep.subr.mxu0 0.0
    %163 = vmatpush1.msra.mxu0 0.0
    %164 = vmatprep.subr.mxu0 0.0
    %165 = vmatpush1.msra.mxu0 0.0
    %166 = vmatprep.subr.mxu0 0.0
    %167 = vmatpush1.msra.mxu0 0.0
    %168 = vmatprep.subr.mxu0 0.0
    %169 = vmatpush1.msra.mxu0 0.0
    %170 = vmatprep.mubr.f32.mxu0 0.0
    %171 = vmatmul.mubr.f32.gmra.mrb[0].mxu0 %v81
    %v172 = vpop.f32.mrb[0].mxu0
    %v173 = vadd.f32 %v104, %v172
    %v174 = vpop.f32.mrb[0].mxu0
    %175 = vmatprep.mubr.f32.mxu0 0.0
    %176 = vmatmul.mubr.f32.gmra.mrb[0].mxu0 %v82
    %v177 = vpop.f32.mrb[0].mxu0
    %v178 = vadd.f32 %v104, %v177
    %v179 = vpop.f32.mrb[0].mxu0
    %180 = vdwg.mxu0
    %v181 = vmax.f32 %v173, 0.0
    %v182 = vmax.f32 %v178, 0.0
    %v183 = vld [vmem:[#allocation10] sm:$0xff]
    %v184 = vld [vmem:[#allocation10 + $0x8] sm:$0xff]
    %v185 = vld [vmem:[#allocation10 + $0x10] sm:$0xff]
    %v186 = vld [vmem:[#allocation10 + $0x18] sm:$0xff]
    %v187 = vld [vmem:[#allocation10 + $0x20] sm:$0xff]
    %v188 = vld [vmem:[#allocation10 + $0x28] sm:$0xff]
    %v189 = vld [vmem:[#allocation10 + $0x30] sm:$0xff]
    %v190 = vld [vmem:[#allocation10 + $0x38] sm:$0xff]
    %v191 = vld [vmem:[#allocation10 + $0x40] sm:$0xff]
    %v192 = vld [vmem:[#allocation10 + $0x48] sm:$0xff]
    %v193 = vld [vmem:[#allocation10 + $0x50] sm:$0xff]
    %v194 = vld [vmem:[#allocation10 + $0x58] sm:$0xff]
    %v195 = vld [vmem:[#allocation10 + $0x60] sm:$0xff]
    %v196 = vld [vmem:[#allocation10 + $0x68] sm:$0xff]
    %v197 = vld [vmem:[#allocation10 + $0x70] sm:$0xff]
    %v198 = vld [vmem:[#allocation10 + $0x78] sm:$0xff]
    %v199 = vld [vmem:[%s5] sm:$0x1]
    %v201 = vlaneseq
    %v202 = vshrl.u32 %v201, 7
    %v203 = vsub.s32 0, %v202
    %v204 = vrot.slane %v199, %v203
    %206 = vmatprep.subr.mxu0 0.0
    %207 = vmatpush1.msra.mxu0 %v183
    %208 = vmatprep.subr.mxu0 0.0
    %209 = vmatpush1.msra.mxu0 %v184
    %210 = vmatprep.subr.mxu0 0.0
    %211 = vmatpush1.msra.mxu0 %v185
    %212 = vmatprep.subr.mxu0 0.0
    %213 = vmatpush1.msra.mxu0 %v186
    %214 = vmatprep.subr.mxu0 0.0
    %215 = vmatpush1.msra.mxu0 %v187
    %216 = vmatprep.subr.mxu0 0.0
    %217 = vmatpush1.msra.mxu0 %v188
    %218 = vmatprep.subr.mxu0 0.0
    %219 = vmatpush1.msra.mxu0 %v189
    %220 = vmatprep.subr.mxu0 0.0
    %221 = vmatpush1.msra.mxu0 %v190
    %222 = vmatprep.subr.mxu0 0.0
    %223 = vmatpush1.msra.mxu0 %v191
    %224 = vmatprep.subr.mxu0 0.0
    %225 = vmatpush1.msra.mxu0 %v192
    %226 = vmatprep.subr.mxu0 0.0
    %227 = vmatpush1.msra.mxu0 %v193
    %228 = vmatprep.subr.mxu0 0.0
    %229 = vmatpush1.msra.mxu0 %v194
    %230 = vmatprep.subr.mxu0 0.0
    %231 = vmatpush1.msra.mxu0 %v195
    %232 = vmatprep.subr.mxu0 0.0
    %233 = vmatpush1.msra.mxu0 %v196
    %234 = vmatprep.subr.mxu0 0.0
    %235 = vmatpush1.msra.mxu0 %v197
    %236 = vmatprep.subr.mxu0 0.0
    %237 = vmatpush1.msra.mxu0 %v198
    %238 = vmatprep.subr.mxu0 0.0
    %239 = vmatpush1.msra.mxu0 0.0
    %240 = vmatprep.subr.mxu0 0.0
    %241 = vmatpush1.msra.mxu0 0.0
    %242 = vmatprep.subr.mxu0 0.0
    %243 = vmatpush1.msra.mxu0 0.0
    %244 = vmatprep.subr.mxu0 0.0
    %245 = vmatpush1.msra.mxu0 0.0
    %246 = vmatprep.subr.mxu0 0.0
    %247 = vmatpush1.msra.mxu0 0.0
    %248 = vmatprep.subr.mxu0 0.0
    %249 = vmatpush1.msra.mxu0 0.0
    %250 = vmatprep.subr.mxu0 0.0
    %251 = vmatpush1.msra.mxu0 0.0
    %252 = vmatprep.subr.mxu0 0.0
    %253 = vmatpush1.msra.mxu0 0.0
    %254 = vmatprep.subr.mxu0 0.0
    %255 = vmatpush1.msra.mxu0 0.0
    %256 = vmatprep.subr.mxu0 0.0
    %257 = vmatpush1.msra.mxu0 0.0
    %258 = vmatprep.subr.mxu0 0.0
    %259 = vmatpush1.msra.mxu0 0.0
    %260 = vmatprep.subr.mxu0 0.0
    %261 = vmatpush1.msra.mxu0 0.0
    %262 = vmatprep.subr.mxu0 0.0
    %263 = vmatpush1.msra.mxu0 0.0
    %264 = vmatprep.subr.mxu0 0.0
    %265 = vmatpush1.msra.mxu0 0.0
    %266 = vmatprep.subr.mxu0 0.0
    %267 = vmatpush1.msra.mxu0 0.0
    %268 = vmatprep.subr.mxu0 0.0
    %269 = vmatpush1.msra.mxu0 0.0
    %270 = vmatprep.mubr.f32.mxu0 0.0
    %271 = vmatmul.mubr.f32.gmra.mrb[0].mxu0 %v181
    %v272 = vpop.f32.mrb[0].mxu0
    %v273 = vadd.f32 %v204, %v272
    %v274 = vpop.f32.mrb[0].mxu0
    %275 = vmatprep.mubr.f32.mxu0 0.0
    %276 = vmatmul.mubr.f32.gmra.mrb[0].mxu0 %v182
    %v277 = vpop.f32.mrb[0].mxu0
    %v278 = vadd.f32 %v204, %v277
    %v279 = vpop.f32.mrb[0].mxu0
    %280 = vdwg.mxu0
    %281 = vst [vmem:[#allocation11] sm:$0xff] %v273
    %282 = vst [vmem:[#allocation11 + $0x8] sm:$0xff] %v278
    %v283 = vlaneseq
    %v284 = vand.u32 %v283, 127
    %v285 = vlaneseq
    %v286 = vshrl.u32 %v285, 7
    %v287 = vadd.s32 %v286, 8
    %vm288 = vcmp.lt.s32.totalorder %v284, 16
    %v289 = vsel %vm288, %v81, -1e+30
    %v290 = vsel %vm288, %v82, -1e+30
    %291 = vmax.xlane.f32.xlu0 %v289
    %v292 = vpop.xlane.xlu0 %291
    %293 = vmax.xlane.f32.xlu0 %v290
    %v294 = vpop.xlane.xlu0 %293
    %v295 = vsub.f32 %v289, %v292
    %v296 = vsub.f32 %v290, %v294
    %v297 = vmul.f32 %v295, 1.442695
    %v298 = vpow.pop %v297
    %v299 = vmul.f32 %v296, 1.442695
    %v300 = vpow.pop %v299
    %301 = vadd.xlane.f32.xlu0 %v298
    %v302 = vpop.xlane.xlu0 %301
    %303 = vadd.xlane.f32.xlu0 %v300
    %v304 = vpop.xlane.xlu0 %303
    %v305 = vlog2.pop %v302
    %v306 = vmul.f32 %v305, 0.6931472
    %v307 = vlog2.pop %v304
    %v308 = vmul.f32 %v307, 0.6931472
    %v309 = vadd.f32 %v292, %v306
    %v310 = vadd.f32 %v294, %v308
    %vm311 = vcmp.lt.s32.totalorder %v286, 8
    %vm312 = vcmp.lt.s32.totalorder %v287, 8
    %v313 = vsel %vm311, %v309, 0.0
    %v314 = vsel %vm312, %v310, 0.0
    %vm315 = vcmask 7168
    %v316 = vsel %vm315, %v313, 0.0
    %v317 = vsel %vm315, %v314, 0.0
    %v318 = vadd.f32 %v316, %v317
    %319 = vadd.xlane.f32.xlu0 %v318
    %v320 = vpop.xlane.xlu0 %319
    %v321 = vrot.slane %v320, 4
    %v322 = vadd.f32 %v320, %v321
    %v323 = vrot.slane %v322, 2
    %v324 = vadd.f32 %v322, %v323
    %v325 = vrot.slane %v324, 1
    %v326 = vadd.f32 %v324, %v325
    %s327 = vtos %v326
    %vm328 = vcmp.ge.s32.totalorder %v286, 8
    %vm329 = vcmp.ge.s32.totalorder %v287, 8
    %v330 = vsel %vm328, %v309, 0.0
    %v331 = vsel %vm329, %v310, 0.0
    %v332 = vsel %vm315, %v330, 0.0
    %v333 = vsel %vm315, %v331, 0.0
    %v334 = vadd.f32 %v332, %v333
    %335 = vadd.xlane.f32.xlu0 %v334
    %v336 = vpop.xlane.xlu0 %335
    %v337 = vrot.slane %v336, 4
    %v338 = vadd.f32 %v336, %v337
    %v339 = vrot.slane %v338, 2
    %v340 = vadd.f32 %v338, %v339
    %v341 = vrot.slane %v340, 1
    %v342 = vadd.f32 %v340, %v341
    %s343 = vtos %v342
    %s344 = sld [smem:[#allocation7]]
    %vm345 = vcmp.eq.s32.totalorder %v286, 0
    %vm346 = vcmp.eq.s32.totalorder %v287, 0
    %v347 = vstv %s344
    %vm348 = vcmp.eq.s32.totalorder %v284, %v347
    %vm349 = vmand %vm345, %vm348
    %vm350 = vmand %vm346, %vm348
    %v351 = vsel %vm349, %v289, 0.0
    %v352 = vsel %vm350, %v290, 0.0
    %v353 = vadd.f32 %v351, %v352
    %354 = vadd.xlane.f32.xlu0 %v353
    %v355 = vpop.xlane.xlu0 %354
    %v356 = vrot.slane %v355, 4
    %v357 = vadd.f32 %v355, %v356
    %v358 = vrot.slane %v357, 2
    %v359 = vadd.f32 %v357, %v358
    %v360 = vrot.slane %v359, 1
    %v361 = vadd.f32 %v359, %v360
    %s362 = vtos %v361
    %s363 = sadd.f32 %s362, 0.0
    %s364 = sld [smem:[#allocation7 + $0x1]]
    %vm365 = vcmp.eq.s32.totalorder %v286, 1
    %vm366 = vcmp.eq.s32.totalorder %v287, 1
    %v367 = vstv %s364
    %vm368 = vcmp.eq.s32.totalorder %v284, %v367
    %vm369 = vmand %vm365, %vm368
    %vm370 = vmand %vm366, %vm368
    %v371 = vsel %vm369, %v289, 0.0
    %v372 = vsel %vm370, %v290, 0.0
    %v373 = vadd.f32 %v371, %v372
    %374 = vadd.xlane.f32.xlu0 %v373
    %v375 = vpop.xlane.xlu0 %374
    %v376 = vrot.slane %v375, 4
    %v377 = vadd.f32 %v375, %v376
    %v378 = vrot.slane %v377, 2
    %v379 = vadd.f32 %v377, %v378
    %v380 = vrot.slane %v379, 1
    %v381 = vadd.f32 %v379, %v380
    %s382 = vtos %v381
    %s383 = sadd.f32 %s363, %s382
    %s384 = sld [smem:[#allocation7 + $0x2]]
    %vm385 = vcmp.eq.s32.totalorder %v286, 2
    %vm386 = vcmp.eq.s32.totalorder %v287, 2
    %v387 = vstv %s384
    %vm388 = vcmp.eq.s32.totalorder %v284, %v387
    %vm389 = vmand %vm385, %vm388
    %vm390 = vmand %vm386, %vm388
    %v391 = vsel %vm389, %v289, 0.0
    %v392 = vsel %vm390, %v290, 0.0
    %v393 = vadd.f32 %v391, %v392
    %394 = vadd.xlane.f32.xlu0 %v393
    %v395 = vpop.xlane.xlu0 %394
    %v396 = vrot.slane %v395, 4
    %v397 = vadd.f32 %v395, %v396
    %v398 = vrot.slane %v397, 2
    %v399 = vadd.f32 %v397, %v398
    %v400 = vrot.slane %v399, 1
    %v401 = vadd.f32 %v399, %v400
    %s402 = vtos %v401
    %s403 = sadd.f32 %s383, %s402
    %s404 = sld [smem:[#allocation7 + $0x3]]
    %vm405 = vcmp.eq.s32.totalorder %v286, 3
    %vm406 = vcmp.eq.s32.totalorder %v287, 3
    %v407 = vstv %s404
    %vm408 = vcmp.eq.s32.totalorder %v284, %v407
    %vm409 = vmand %vm405, %vm408
    %vm410 = vmand %vm406, %vm408
    %v411 = vsel %vm409, %v289, 0.0
    %v412 = vsel %vm410, %v290, 0.0
    %v413 = vadd.f32 %v411, %v412
    %414 = vadd.xlane.f32.xlu0 %v413
    %v415 = vpop.xlane.xlu0 %414
    %v416 = vrot.slane %v415, 4
    %v417 = vadd.f32 %v415, %v416
    %v418 = vrot.slane %v417, 2
    %v419 = vadd.f32 %v417, %v418
    %v420 = vrot.slane %v419, 1
    %v421 = vadd.f32 %v419, %v420
    %s422 = vtos %v421
    %s423 = sadd.f32 %s403, %s422
    %s424 = sld [smem:[#allocation7 + $0x4]]
    %vm425 = vcmp.eq.s32.totalorder %v286, 4
    %vm426 = vcmp.eq.s32.totalorder %v287, 4
    %v427 = vstv %s424
    %vm428 = vcmp.eq.s32.totalorder %v284, %v427
    %vm429 = vmand %vm425, %vm428
    %vm430 = vmand %vm426, %vm428
    %v431 = vsel %vm429, %v289, 0.0
    %v432 = vsel %vm430, %v290, 0.0
    %v433 = vadd.f32 %v431, %v432
    %434 = vadd.xlane.f32.xlu0 %v433
    %v435 = vpop.xlane.xlu0 %434
    %v436 = vrot.slane %v435, 4
    %v437 = vadd.f32 %v435, %v436
    %v438 = vrot.slane %v437, 2
    %v439 = vadd.f32 %v437, %v438
    %v440 = vrot.slane %v439, 1
    %v441 = vadd.f32 %v439, %v440
    %s442 = vtos %v441
    %s443 = sadd.f32 %s423, %s442
    %s444 = sld [smem:[#allocation7 + $0x5]]
    %vm445 = vcmp.eq.s32.totalorder %v286, 5
    %vm446 = vcmp.eq.s32.totalorder %v287, 5
    %v447 = vstv %s444
    %vm448 = vcmp.eq.s32.totalorder %v284, %v447
    %vm449 = vmand %vm445, %vm448
    %vm450 = vmand %vm446, %vm448
    %v451 = vsel %vm449, %v289, 0.0
    %v452 = vsel %vm450, %v290, 0.0
    %v453 = vadd.f32 %v451, %v452
    %454 = vadd.xlane.f32.xlu0 %v453
    %v455 = vpop.xlane.xlu0 %454
    %v456 = vrot.slane %v455, 4
    %v457 = vadd.f32 %v455, %v456
    %v458 = vrot.slane %v457, 2
    %v459 = vadd.f32 %v457, %v458
    %v460 = vrot.slane %v459, 1
    %v461 = vadd.f32 %v459, %v460
    %s462 = vtos %v461
    %s463 = sadd.f32 %s443, %s462
    %s464 = sld [smem:[#allocation7 + $0x6]]
    %vm465 = vcmp.eq.s32.totalorder %v286, 6
    %vm466 = vcmp.eq.s32.totalorder %v287, 6
    %v467 = vstv %s464
    %vm468 = vcmp.eq.s32.totalorder %v284, %v467
    %vm469 = vmand %vm465, %vm468
    %vm470 = vmand %vm466, %vm468
    %v471 = vsel %vm469, %v289, 0.0
    %v472 = vsel %vm470, %v290, 0.0
    %v473 = vadd.f32 %v471, %v472
    %474 = vadd.xlane.f32.xlu0 %v473
    %v475 = vpop.xlane.xlu0 %474
    %v476 = vrot.slane %v475, 4
    %v477 = vadd.f32 %v475, %v476
    %v478 = vrot.slane %v477, 2
    %v479 = vadd.f32 %v477, %v478
    %v480 = vrot.slane %v479, 1
    %v481 = vadd.f32 %v479, %v480
    %s482 = vtos %v481
    %s483 = sadd.f32 %s463, %s482
    %s484 = sld [smem:[#allocation7 + $0x7]]
    %vm485 = vcmp.eq.s32.totalorder %v286, 7
    %vm486 = vcmp.eq.s32.totalorder %v287, 7
    %v487 = vstv %s484
    %vm488 = vcmp.eq.s32.totalorder %v284, %v487
    %vm489 = vmand %vm485, %vm488
    %vm490 = vmand %vm486, %vm488
    %v491 = vsel %vm489, %v289, 0.0
    %v492 = vsel %vm490, %v290, 0.0
    %v493 = vadd.f32 %v491, %v492
    %494 = vadd.xlane.f32.xlu0 %v493
    %v495 = vpop.xlane.xlu0 %494
    %v496 = vrot.slane %v495, 4
    %v497 = vadd.f32 %v495, %v496
    %v498 = vrot.slane %v497, 2
    %v499 = vadd.f32 %v497, %v498
    %v500 = vrot.slane %v499, 1
    %v501 = vadd.f32 %v499, %v500
    %s502 = vtos %v501
    %s503 = sadd.f32 %s483, %s502
    %s504 = sld [smem:[#allocation7 + $0x8]]
    %vm505 = vcmp.eq.s32.totalorder %v286, 8
    %vm506 = vcmp.eq.s32.totalorder %v287, 8
    %v507 = vstv %s504
    %vm508 = vcmp.eq.s32.totalorder %v284, %v507
    %vm509 = vmand %vm505, %vm508
    %vm510 = vmand %vm506, %vm508
    %v511 = vsel %vm509, %v289, 0.0
    %v512 = vsel %vm510, %v290, 0.0
    %v513 = vadd.f32 %v511, %v512
    %514 = vadd.xlane.f32.xlu0 %v513
    %v515 = vpop.xlane.xlu0 %514
    %v516 = vrot.slane %v515, 4
    %v517 = vadd.f32 %v515, %v516
    %v518 = vrot.slane %v517, 2
    %v519 = vadd.f32 %v517, %v518
    %v520 = vrot.slane %v519, 1
    %v521 = vadd.f32 %v519, %v520
    %s522 = vtos %v521
    %s523 = sadd.f32 %s522, 0.0
    %s524 = sld [smem:[#allocation7 + $0x9]]
    %vm525 = vcmp.eq.s32.totalorder %v286, 9
    %vm526 = vcmp.eq.s32.totalorder %v287, 9
    %v527 = vstv %s524
    %vm528 = vcmp.eq.s32.totalorder %v284, %v527
    %vm529 = vmand %vm525, %vm528
    %vm530 = vmand %vm526, %vm528
    %v531 = vsel %vm529, %v289, 0.0
    %v532 = vsel %vm530, %v290, 0.0
    %v533 = vadd.f32 %v531, %v532
    %534 = vadd.xlane.f32.xlu0 %v533
    %v535 = vpop.xlane.xlu0 %534
    %v536 = vrot.slane %v535, 4
    %v537 = vadd.f32 %v535, %v536
    %v538 = vrot.slane %v537, 2
    %v539 = vadd.f32 %v537, %v538
    %v540 = vrot.slane %v539, 1
    %v541 = vadd.f32 %v539, %v540
    %s542 = vtos %v541
    %s543 = sadd.f32 %s523, %s542
    %s544 = sld [smem:[#allocation7 + $0xa]]
    %vm545 = vcmp.eq.s32.totalorder %v286, 10
    %vm546 = vcmp.eq.s32.totalorder %v287, 10
    %v547 = vstv %s544
    %vm548 = vcmp.eq.s32.totalorder %v284, %v547
    %vm549 = vmand %vm545, %vm548
    %vm550 = vmand %vm546, %vm548
    %v551 = vsel %vm549, %v289, 0.0
    %v552 = vsel %vm550, %v290, 0.0
    %v553 = vadd.f32 %v551, %v552
    %554 = vadd.xlane.f32.xlu0 %v553
    %v555 = vpop.xlane.xlu0 %554
    %v556 = vrot.slane %v555, 4
    %v557 = vadd.f32 %v555, %v556
    %v558 = vrot.slane %v557, 2
    %v559 = vadd.f32 %v557, %v558
    %v560 = vrot.slane %v559, 1
    %v561 = vadd.f32 %v559, %v560
    %s562 = vtos %v561
    %s563 = sadd.f32 %s543, %s562
    %s564 = sld [smem:[#allocation7 + $0xb]]
    %vm565 = vcmp.eq.s32.totalorder %v286, 11
    %vm566 = vcmp.eq.s32.totalorder %v287, 11
    %v567 = vstv %s564
    %vm568 = vcmp.eq.s32.totalorder %v284, %v567
    %vm569 = vmand %vm565, %vm568
    %vm570 = vmand %vm566, %vm568
    %v571 = vsel %vm569, %v289, 0.0
    %v572 = vsel %vm570, %v290, 0.0
    %v573 = vadd.f32 %v571, %v572
    %574 = vadd.xlane.f32.xlu0 %v573
    %v575 = vpop.xlane.xlu0 %574
    %v576 = vrot.slane %v575, 4
    %v577 = vadd.f32 %v575, %v576
    %v578 = vrot.slane %v577, 2
    %v579 = vadd.f32 %v577, %v578
    %v580 = vrot.slane %v579, 1
    %v581 = vadd.f32 %v579, %v580
    %s582 = vtos %v581
    %s583 = sadd.f32 %s563, %s582
    %s584 = sld [smem:[#allocation7 + $0xc]]
    %vm585 = vcmp.eq.s32.totalorder %v286, 12
    %vm586 = vcmp.eq.s32.totalorder %v287, 12
    %v587 = vstv %s584
    %vm588 = vcmp.eq.s32.totalorder %v284, %v587
    %vm589 = vmand %vm585, %vm588
    %vm590 = vmand %vm586, %vm588
    %v591 = vsel %vm589, %v289, 0.0
    %v592 = vsel %vm590, %v290, 0.0
    %v593 = vadd.f32 %v591, %v592
    %594 = vadd.xlane.f32.xlu0 %v593
    %v595 = vpop.xlane.xlu0 %594
    %v596 = vrot.slane %v595, 4
    %v597 = vadd.f32 %v595, %v596
    %v598 = vrot.slane %v597, 2
    %v599 = vadd.f32 %v597, %v598
    %v600 = vrot.slane %v599, 1
    %v601 = vadd.f32 %v599, %v600
    %s602 = vtos %v601
    %s603 = sadd.f32 %s583, %s602
    %s604 = sld [smem:[#allocation7 + $0xd]]
    %vm605 = vcmp.eq.s32.totalorder %v286, 13
    %vm606 = vcmp.eq.s32.totalorder %v287, 13
    %v607 = vstv %s604
    %vm608 = vcmp.eq.s32.totalorder %v284, %v607
    %vm609 = vmand %vm605, %vm608
    %vm610 = vmand %vm606, %vm608
    %v611 = vsel %vm609, %v289, 0.0
    %v612 = vsel %vm610, %v290, 0.0
    %v613 = vadd.f32 %v611, %v612
    %614 = vadd.xlane.f32.xlu0 %v613
    %v615 = vpop.xlane.xlu0 %614
    %v616 = vrot.slane %v615, 4
    %v617 = vadd.f32 %v615, %v616
    %v618 = vrot.slane %v617, 2
    %v619 = vadd.f32 %v617, %v618
    %v620 = vrot.slane %v619, 1
    %v621 = vadd.f32 %v619, %v620
    %s622 = vtos %v621
    %s623 = sadd.f32 %s603, %s622
    %s624 = sld [smem:[#allocation7 + $0xe]]
    %vm625 = vcmp.eq.s32.totalorder %v286, 14
    %vm626 = vcmp.eq.s32.totalorder %v287, 14
    %v627 = vstv %s624
    %vm628 = vcmp.eq.s32.totalorder %v284, %v627
    %vm629 = vmand %vm625, %vm628
    %vm630 = vmand %vm626, %vm628
    %v631 = vsel %vm629, %v289, 0.0
    %v632 = vsel %vm630, %v290, 0.0
    %v633 = vadd.f32 %v631, %v632
    %634 = vadd.xlane.f32.xlu0 %v633
    %v635 = vpop.xlane.xlu0 %634
    %v636 = vrot.slane %v635, 4
    %v637 = vadd.f32 %v635, %v636
    %v638 = vrot.slane %v637, 2
    %v639 = vadd.f32 %v637, %v638
    %v640 = vrot.slane %v639, 1
    %v641 = vadd.f32 %v639, %v640
    %s642 = vtos %v641
    %s643 = sadd.f32 %s623, %s642
    %s644 = sld [smem:[#allocation7 + $0xf]]
    %vm645 = vcmp.eq.s32.totalorder %v286, 15
    %vm646 = vcmp.eq.s32.totalorder %v287, 15
    %v647 = vstv %s644
    %vm648 = vcmp.eq.s32.totalorder %v284, %v647
    %vm649 = vmand %vm645, %vm648
    %vm650 = vmand %vm646, %vm648
    %v651 = vsel %vm649, %v289, 0.0
    %v652 = vsel %vm650, %v290, 0.0
    %v653 = vadd.f32 %v651, %v652
    %654 = vadd.xlane.f32.xlu0 %v653
    %v655 = vpop.xlane.xlu0 %654
    %v656 = vrot.slane %v655, 4
    %v657 = vadd.f32 %v655, %v656
    %v658 = vrot.slane %v657, 2
    %v659 = vadd.f32 %v657, %v658
    %v660 = vrot.slane %v659, 1
    %v661 = vadd.f32 %v659, %v660
    %s662 = vtos %v661
    %s663 = sadd.f32 %s643, %s662
    %s664 = ssub.f32 %s327, %s503
    %v665 = vrcp.pop 8.0
    %s666 = vtos %v665
    %s667 = smul.f32 %s664, %s666
    %s668 = scalar_lea.smem [#allocation12], 0
    %669 = sst [smem:[%s668]] %s667
    %s670 = ssub.f32 %s343, %s663
    %v671 = vrcp.pop 8.0
    %s672 = vtos %v671
    %s673 = smul.f32 %s670, %s672
    %s674 = scalar_lea.smem [#allocation12], 1
    %675 = sst [smem:[%s674]] %s673
    // Predicated region
    $region42: #{tpu_custom_call.1} parent=1 // pred_check
      _
    $region43: #{tpu_custom_call.1} parent=1 // pred_check_branch
      %677 = sbr.rel (0) target = $region45
    $region44: #{tpu_custom_call.1} parent=1 // pred_region
      %s679 = ssub.s32 256, 256
      %680 = vsyncadd [#allocation4], %s679
      %s681 = sshll.u32 [#allocation11], 4
      %s682 = int_to_ptr.vmem [resolvable:$true] %s681
      %687 = dma.vmem_to_hbm [thread:$0]  %s682, 256, %s6, [#allocation4], 128, 128, 8
    $region45: #{tpu_custom_call.1} parent=1 // pred_fallthru
      _
    // Predicated region
    $region46: #{tpu_custom_call.1} parent=1 // pred_check
      _
    $region47: #{tpu_custom_call.1} parent=1 // pred_check_branch
      %689 = sbr.rel (0) target = $region49
    $region48: #{tpu_custom_call.1} parent=1 // pred_region
      %s691 = ssub.s32 16, 16
      %692 = vsyncadd [#allocation5], %s691
      %695 = dma.smem_to_hbm [#allocation12], 16, %s7, [#allocation5]
    $region49: #{tpu_custom_call.1} parent=1 // pred_fallthru
      _
    // Predicated region
    $region50: #{tpu_custom_call.1} parent=1 // pred_check
      _
    $region51: #{tpu_custom_call.1} parent=1 // pred_check_branch
      %697 = sbr.rel (0) target = $region53
    $region52: #{tpu_custom_call.1} parent=1 // pred_region
      %698 = dma.done [#allocation4], 256
    $region53: #{tpu_custom_call.1} parent=1 // pred_fallthru
      _
    // Predicated region
    $region54: #{tpu_custom_call.1} parent=1 // pred_check
      _
    $region55: #{tpu_custom_call.1} parent=1 // pred_check_branch
      %700 = sbr.rel (0) target = $region57
    $region56: #{tpu_custom_call.1} parent=1 // pred_region
      %701 = dma.done [#allocation5], 16
    $region57: #{tpu_custom_call.1} parent=1 // pred_fallthru
      _
    %702 = sfence
    %703 = vsyncpa [#allocation3], 1
    %704 = vsyncpa [#allocation9], 1
    %705 = vsyncpa [#allocation4], 1
    %706 = vsyncpa [#allocation5], 1
    %707 = vsyncpa [#allocation6], 1

</llo_original>
